<compile_context>
chip_gen: v7x
topology: tpu7x:2x2x1
jax: 0.10.0
libtpu: 0.0.40
codegen_flags: <defaults>
</compile_context>

<pallas_src>
import jax
import jax.numpy as jnp
from jax.experimental import pallas as pl
from jax.experimental.pallas import tpu as pltpu


def _round_up(x, m):
    return (x + m - 1) // m * m


# ---------------------------------------------------------------------------
# Kernel 1 (two-pass path): streaming elementwise weight perturbation.
#   W_eff[K, N] = W_mean_T + W_noise_T * eps_W_T * sigma
# ---------------------------------------------------------------------------
def _perturb_weight_kernel(sigma_ref, wm_ref, wn_ref, ew_ref, weff_ref):
    sigma = sigma_ref[0]
    weff_ref[...] = wm_ref[...] + wn_ref[...] * ew_ref[...] * sigma


# ---------------------------------------------------------------------------
# Kernel 2 (two-pass path): tiled matmul + noisy bias.
#   y = x @ W_eff + (b_mean + b_noise * eps_b * sigma)
# ---------------------------------------------------------------------------
def _matmul_bias_kernel(sigma_ref, x_ref, w_ref, bm_ref, bn_ref, eb_ref,
                        o_ref, acc_ref):
    k = pl.program_id(2)

    @pl.when(k == 0)
    def _():
        acc_ref[...] = jnp.zeros_like(acc_ref)

    acc_ref[...] += jax.lax.dot_general(
        x_ref[...], w_ref[...],
        dimension_numbers=(((1,), (0,)), ((), ())),   # [tm,tk] @ [tk,tn]
        preferred_element_type=jnp.float32,
    )

    @pl.when(k == pl.num_programs(2) - 1)
    def _():
        sigma = sigma_ref[0]
        b_eff = bm_ref[...] + bn_ref[...] * eb_ref[...] * sigma   # [1, tn]
        o_ref[...] = (acc_ref[...] + b_eff).astype(o_ref.dtype)


# ---------------------------------------------------------------------------
# Fused kernel (single-M-tile path): perturb weight tile + matmul + bias in
# one pass; avoids the W_eff HBM round trip when every weight tile is only
# needed once anyway.
# ---------------------------------------------------------------------------
def _fused_noisy_matmul_kernel(sigma_ref, x_ref, wm_ref, wn_ref, ew_ref,
                               bm_ref, bn_ref, eb_ref, o_ref, acc_ref):
    k = pl.program_id(2)
    sigma = sigma_ref[0]

    @pl.when(k == 0)
    def _():
        acc_ref[...] = jnp.zeros_like(acc_ref)

    w_eff = wm_ref[...] + wn_ref[...] * ew_ref[...] * sigma        # [tk, tn]
    acc_ref[...] += jax.lax.dot_general(
        x_ref[...], w_eff,
        dimension_numbers=(((1,), (0,)), ((), ())),
        preferred_element_type=jnp.float32,
    )

    @pl.when(k == pl.num_programs(2) - 1)
    def _():
        b_eff = bm_ref[...] + bn_ref[...] * eb_ref[...] * sigma    # [1, tn]
        o_ref[...] = (acc_ref[...] + b_eff).astype(o_ref.dtype)


# ---------------------------------------------------------------------------
# Wrapper
# ---------------------------------------------------------------------------
def _noisy_linear_impl(x, w_mean, w_noise, eps_w, b_mean, b_noise, eps_b,
                       sigma):
    dtype = jnp.float32
    batch, in_features = x.shape
    out_features = w_mean.shape[0]

    # Tile sizes: lane-dense multiples of 128 on K/N, multiples of 8 on M,
    # capped so double-buffered VMEM fits every TPU generation (incl. v7x).
    tm = min(256, _round_up(batch, 8))
    tk = min(512, _round_up(in_features, 128))
    tn = min(512, _round_up(out_features, 128))

    M = _round_up(batch, tm)
    K = _round_up(in_features, tk)
    N = _round_up(out_features, tn)
    m_tiles, n_tiles, k_tiles = M // tm, N // tn, K // tk

    # Layout plumbing in the wrapper: [out, in] -> [in, out], zero-pad to the
    # tiled extents (zero K-padding contributes nothing to the matmul; padded
    # N columns are sliced off at the end).
    def pad2(a, rows, cols):
        return jnp.pad(a, ((0, rows - a.shape[0]), (0, cols - a.shape[1])))

    x_p = pad2(x.astype(dtype), M, K)
    wm_p = pad2(w_mean.T.astype(dtype), K, N)
    wn_p = pad2(w_noise.T.astype(dtype), K, N)
    ew_p = pad2(eps_w.T.astype(dtype), K, N)
    bm_p = pad2(b_mean.reshape(1, out_features).astype(dtype), 1, N)
    bn_p = pad2(b_noise.reshape(1, out_features).astype(dtype), 1, N)
    eb_p = pad2(eps_b.reshape(1, out_features).astype(dtype), 1, N)

    sigma_arr = jnp.full((1,), sigma, dtype=dtype)            # SMEM scalar
    smem_spec = pl.BlockSpec(memory_space=pltpu.MemorySpace.SMEM)

    x_spec = pl.BlockSpec((tm, tk), lambda i, j, k: (i, k))
    w_spec = pl.BlockSpec((tk, tn), lambda i, j, k: (k, j))
    b_spec = pl.BlockSpec((1, tn), lambda i, j, k: (0, j))
    o_spec = pl.BlockSpec((tm, tn), lambda i, j, k: (i, j))
    mm_params = pltpu.CompilerParams(
        dimension_semantics=("parallel", "parallel", "arbitrary"))

    if m_tiles == 1:
        # ---- fused single pass ----
        y_p = pl.pallas_call(
            _fused_noisy_matmul_kernel,
            out_shape=jax.ShapeDtypeStruct((M, N), dtype),
            grid_spec=pltpu.PrefetchScalarGridSpec(
                num_scalar_prefetch=0,
                grid=(m_tiles, n_tiles, k_tiles),
                in_specs=[smem_spec, x_spec, w_spec, w_spec, w_spec,
                          b_spec, b_spec, b_spec],
                out_specs=o_spec,
                scratch_shapes=[pltpu.VMEM((tm, tn), jnp.float32)],
            ),
            compiler_params=mm_params,
        )(sigma_arr, x_p, wm_p, wn_p, ew_p, bm_p, bn_p, eb_p)
    else:
        # ---- pass 1: materialise W_eff once (streaming elementwise) ----
        pw_spec = pl.BlockSpec((tk, tn), lambda i, j: (i, j))
        w_eff = pl.pallas_call(
            _perturb_weight_kernel,
            out_shape=jax.ShapeDtypeStruct((K, N), dtype),
            grid_spec=pltpu.PrefetchScalarGridSpec(
                num_scalar_prefetch=0,
                grid=(k_tiles, n_tiles),
                in_specs=[smem_spec, pw_spec, pw_spec, pw_spec],
                out_specs=pw_spec,
            ),
            compiler_params=pltpu.CompilerParams(
                dimension_semantics=("parallel", "parallel")),
        )(sigma_arr, wm_p, wn_p, ew_p)

        # ---- pass 2: standard tiled matmul + noisy bias ----
        y_p = pl.pallas_call(
            _matmul_bias_kernel,
            out_shape=jax.ShapeDtypeStruct((M, N), dtype),
            grid_spec=pltpu.PrefetchScalarGridSpec(
                num_scalar_prefetch=0,
                grid=(m_tiles, n_tiles, k_tiles),
                in_specs=[smem_spec, x_spec, w_spec,
                          b_spec, b_spec, b_spec],
                out_specs=o_spec,
                scratch_shapes=[pltpu.VMEM((tm, tn), jnp.float32)],
            ),
            compiler_params=mm_params,
        )(sigma_arr, x_p, w_eff, bm_p, bn_p, eb_p)

    return y_p[:batch, :out_features]


noisy_linear = jax.jit(_noisy_linear_impl)


# ---------------------------------------------------------------------------
# Demo / correctness check
# ---------------------------------------------------------------------------
if __name__ == "__main__":

    def run_case(key, batch, in_features, out_features, sigma):
        keys = jax.random.split(key, 7)
        bound = 1.0 / float(in_features) ** 0.5
        w_mean = jax.random.uniform(keys[0], (out_features, in_features),
                                    jnp.float32, -bound, bound)
        b_mean = jax.random.uniform(keys[1], (out_features,), jnp.float32,
                                    -bound, bound)
        w_noise = jax.random.uniform(keys[2], (out_features, in_features),
                                     jnp.float32, -bound, bound)
        b_noise = jax.random.uniform(keys[3], (out_features,), jnp.float32,
                                     -bound, bound)
        # Fresh standard-normal noise (torch.randn_like equivalent).
        eps_w = jax.random.normal(keys[4], (out_features, in_features),
                                  jnp.float32)
        eps_b = jax.random.normal(keys[5], (out_features,), jnp.float32)
        x = jax.random.normal(keys[6], (batch, in_features), jnp.float32)

        y = noisy_linear(x, w_mean, w_noise, eps_w, b_mean, b_noise, eps_b,
                         sigma)
        y = jax.block_until_ready(y)

        # Plain-JAX reference.
        w_eff = w_mean + w_noise * eps_w * sigma
        b_eff = b_mean + b_noise * eps_b * sigma
        y_ref = x @ w_eff.T + b_eff
        assert y.shape == (batch, out_features)
        err = float(jnp.max(jnp.abs(y - y_ref)))
        assert jnp.allclose(y, y_ref, atol=1e-3, rtol=1e-3), err

    key = jax.random.PRNGKey(0)
    k1, k2 = jax.random.split(key)
    # Small batch -> fused single-kernel path (one M tile).
    run_case(k1, batch=4, in_features=32, out_features=16, sigma=0.5)
    # Larger batch -> two-pass path (W_eff materialised once, then tiled matmul).
    run_case(k2, batch=512, in_features=256, out_features=128, sigma=0.5)

    print("KERNEL_OK")
</pallas_src>

<mosaic_0001>
module attributes {stable_mosaic.version = 11 : i64} {
  func.func @_fused_noisy_matmul_kernel(%arg0: i32, %arg1: i32, %arg2: i32, %arg3: memref<1xf32, #tpu.memory_space<smem>>, %arg4: memref<8x128xf32, #tpu.memory_space<vmem>>, %arg5: memref<128x128xf32, #tpu.memory_space<vmem>>, %arg6: memref<128x128xf32, #tpu.memory_space<vmem>>, %arg7: memref<128x128xf32, #tpu.memory_space<vmem>>, %arg8: memref<1x128xf32, #tpu.memory_space<vmem>>, %arg9: memref<1x128xf32, #tpu.memory_space<vmem>>, %arg10: memref<1x128xf32, #tpu.memory_space<vmem>>, %arg11: memref<8x128xf32, #tpu.memory_space<vmem>>, %arg12: memref<8x128xf32, #tpu.memory_space<vmem>>) attributes {dimension_semantics = [#tpu.dimension_semantics<parallel>, #tpu.dimension_semantics<parallel>, #tpu.dimension_semantics<arbitrary>], iteration_bounds = array<i64: 1, 1, 1>, scalar_prefetch = 0 : i64, scratch_operands = 1 : i64, tpu.core_type = #tpu.core_type<tc>, window_params = [{transform_indices = @transform_0, window_bounds = array<i64: 1>}, {transform_indices = @transform_1, window_bounds = array<i64: 8, 128>}, {transform_indices = @transform_2, window_bounds = array<i64: 128, 128>}, {transform_indices = @transform_3, window_bounds = array<i64: 128, 128>}, {transform_indices = @transform_4, window_bounds = array<i64: 128, 128>}, {transform_indices = @transform_5, window_bounds = array<i64: 1, 128>}, {transform_indices = @transform_6, window_bounds = array<i64: 1, 128>}, {transform_indices = @transform_7, window_bounds = array<i64: 1, 128>}, {transform_indices = @transform_8, window_bounds = array<i64: 8, 128>}]} {
    %c0 = arith.constant 0 : index
    %0 = memref.load %arg3[%c0] : memref<1xf32, #tpu.memory_space<smem>>
    %c0_i32 = arith.constant 0 : i32
    %1 = arith.cmpi eq, %arg2, %c0_i32 : i32
    %2 = arith.extui %1 : i1 to i32
    %c0_i32_0 = arith.constant 0 : i32
    %3 = arith.cmpi ne, %2, %c0_i32_0 : i32
    scf.if %3 {
      %cst_15 = arith.constant 0.000000e+00 : f32
      %19 = vector.broadcast %cst_15 : f32 to vector<8x128xf32>
      %c0_16 = arith.constant 0 : index
      %c0_17 = arith.constant 0 : index
      %20 = vector.load %arg12[%c0_16, %c0_17] : memref<8x128xf32, #tpu.memory_space<vmem>>, vector<8x128xf32>
      tpu.vector_store %arg12[%c0_16, %c0_17], %19 {strides = array<i32>} : memref<8x128xf32, #tpu.memory_space<vmem>>, vector<8x128xf32>,
    } else {
    }
    %c0_1 = arith.constant 0 : index
    %c0_2 = arith.constant 0 : index
    %4 = vector.load %arg5[%c0_1, %c0_2] : memref<128x128xf32, #tpu.memory_space<vmem>>, vector<128x128xf32>
    %c0_3 = arith.constant 0 : index
    %c0_4 = arith.constant 0 : index
    %5 = vector.load %arg6[%c0_3, %c0_4] : memref<128x128xf32, #tpu.memory_space<vmem>>, vector<128x128xf32>
    %c0_5 = arith.constant 0 : index
    %c0_6 = arith.constant 0 : index
    %6 = vector.load %arg7[%c0_5, %c0_6] : memref<128x128xf32, #tpu.memory_space<vmem>>, vector<128x128xf32>
    %7 = arith.mulf %5, %6 : vector<128x128xf32>
    %8 = vector.broadcast %0 : f32 to vector<128x128xf32>
    %9 = arith.mulf %7, %8 : vector<128x128xf32>
    %10 = arith.addf %4, %9 : vector<128x128xf32>
    %c0_7 = arith.constant 0 : index
    %c0_8 = arith.constant 0 : index
    %11 = vector.load %arg12[%c0_7, %c0_8] : memref<8x128xf32, #tpu.memory_space<vmem>>, vector<8x128xf32>
    %c0_9 = arith.constant 0 : index
    %c0_10 = arith.constant 0 : index
    %12 = vector.load %arg4[%c0_9, %c0_10] : memref<8x128xf32, #tpu.memory_space<vmem>>, vector<8x128xf32>
    %cst = arith.constant dense<0.000000e+00> : vector<8x128xf32>
    %13 = tpu.matmul %12, %10, %cst {dimension_numbers = #tpu.dot_dimension_numbers<[1], [0], [0], [1], [0, 0, 1, 1], [], []>} : vector<8x128xf32>, vector<128x128xf32>, vector<8x128xf32> -> vector<8x128xf32>
    %14 = arith.addf %11, %13 : vector<8x128xf32>
    %c0_11 = arith.constant 0 : index
    %c0_12 = arith.constant 0 : index
    %15 = vector.load %arg12[%c0_11, %c0_12] : memref<8x128xf32, #tpu.memory_space<vmem>>, vector<8x128xf32>
    tpu.vector_store %arg12[%c0_11, %c0_12], %14 {strides = array<i32>} : memref<8x128xf32, #tpu.memory_space<vmem>>, vector<8x128xf32>,
    %c0_i32_13 = arith.constant 0 : i32
    %16 = arith.cmpi eq, %arg2, %c0_i32_13 : i32
    %17 = arith.extui %16 : i1 to i32
    %c0_i32_14 = arith.constant 0 : i32
    %18 = arith.cmpi ne, %17, %c0_i32_14 : i32
    scf.if %18 {
      %c0_15 = arith.constant 0 : index
      %c0_16 = arith.constant 0 : index
      %19 = vector.load %arg8[%c0_15, %c0_16] : memref<1x128xf32, #tpu.memory_space<vmem>>, vector<1x128xf32>
      %c0_17 = arith.constant 0 : index
      %c0_18 = arith.constant 0 : index
      %20 = vector.load %arg9[%c0_17, %c0_18] : memref<1x128xf32, #tpu.memory_space<vmem>>, vector<1x128xf32>
      %c0_19 = arith.constant 0 : index
      %c0_20 = arith.constant 0 : index
      %21 = vector.load %arg10[%c0_19, %c0_20] : memref<1x128xf32, #tpu.memory_space<vmem>>, vector<1x128xf32>
      %22 = arith.mulf %20, %21 : vector<1x128xf32>
      %23 = vector.broadcast %0 : f32 to vector<1x128xf32>
      %24 = arith.mulf %22, %23 : vector<1x128xf32>
      %25 = arith.addf %19, %24 : vector<1x128xf32>
      %c0_21 = arith.constant 0 : index
      %c0_22 = arith.constant 0 : index
      %26 = vector.load %arg12[%c0_21, %c0_22] : memref<8x128xf32, #tpu.memory_space<vmem>>, vector<8x128xf32>
      %27 = vector.broadcast %25 : vector<1x128xf32> to vector<8x128xf32>
      %28 = arith.addf %26, %27 : vector<8x128xf32>
      %c0_23 = arith.constant 0 : index
      %c0_24 = arith.constant 0 : index
      %29 = vector.load %arg11[%c0_23, %c0_24] : memref<8x128xf32, #tpu.memory_space<vmem>>, vector<8x128xf32>
      tpu.vector_store %arg11[%c0_23, %c0_24], %28 {strides = array<i32>} : memref<8x128xf32, #tpu.memory_space<vmem>>, vector<8x128xf32>,
    } else {
    }
    return
  }
  func.func @transform_0(%arg0: i32, %arg1: i32, %arg2: i32) -> i32 {
    %c0_i32 = arith.constant 0 : i32
    %c0_i32_0 = arith.constant 0 : i32
    return %c0_i32 : i32
  }
  func.func @transform_1(%arg0: i32, %arg1: i32, %arg2: i32) -> (i32, i32) {
    %c0_i32 = arith.constant 0 : i32
    return %arg0, %arg2 : i32, i32
  }
  func.func @transform_2(%arg0: i32, %arg1: i32, %arg2: i32) -> (i32, i32) {
    %c0_i32 = arith.constant 0 : i32
    return %arg2, %arg1 : i32, i32
  }
  func.func @transform_3(%arg0: i32, %arg1: i32, %arg2: i32) -> (i32, i32) {
    %c0_i32 = arith.constant 0 : i32
    return %arg2, %arg1 : i32, i32
  }
  func.func @transform_4(%arg0: i32, %arg1: i32, %arg2: i32) -> (i32, i32) {
    %c0_i32 = arith.constant 0 : i32
    return %arg2, %arg1 : i32, i32
  }
  func.func @transform_5(%arg0: i32, %arg1: i32, %arg2: i32) -> (i32, i32) {
    %c0_i32 = arith.constant 0 : i32
    %c0_i32_0 = arith.constant 0 : i32
    return %c0_i32, %arg1 : i32, i32
  }
  func.func @transform_6(%arg0: i32, %arg1: i32, %arg2: i32) -> (i32, i32) {
    %c0_i32 = arith.constant 0 : i32
    %c0_i32_0 = arith.constant 0 : i32
    return %c0_i32, %arg1 : i32, i32
  }
  func.func @transform_7(%arg0: i32, %arg1: i32, %arg2: i32) -> (i32, i32) {
    %c0_i32 = arith.constant 0 : i32
    %c0_i32_0 = arith.constant 0 : i32
    return %c0_i32, %arg1 : i32, i32
  }
  func.func @transform_8(%arg0: i32, %arg1: i32, %arg2: i32) -> (i32, i32) {
    %c0_i32 = arith.constant 0 : i32
    return %arg0, %arg1 : i32, i32
  }
}

</mosaic_0001>

<llo_original>
// kernel: _noisy_linear_impl.1
$region0: #{_noisy_linear_impl.1}
  #allocation0 [shape = 'u32[]', space=smem, size = 0x4, offset = 0x4, fixed_abs, tag = 'smem constant byte address 0x4 - core index']
  #allocation1 [shape = 'u32[144,128]{1,0:T(1,128)}', space=vmem, size = 0x12000, scoped, tag = 'internal scratch']
  #allocation2 [shape = 'f32[8,128]{1,0:T(8,128)}', space=vmem, size = 0x1000, scoped, tag = 'scratch operand']
  #allocation3 [shape = 'f32[1]{0:T(128)S(6)}', space=smem, size = 0x200, scoped, tag = 'scoped memory for _noisy_linear_impl.1']
  %s0 = inlined_call_operand.<no memory space> [shape: f32[1], index: 0, kind: input, shape index: {}]
  %s1 = inlined_call_operand.vmem [shape: f32[8,128], index: 1, kind: input, shape index: {}]
  %s2 = inlined_call_operand.vmem [shape: f32[128,128], index: 2, kind: input, shape index: {}]
  %s3 = inlined_call_operand.vmem [shape: f32[128,128], index: 3, kind: input, shape index: {}]
  %s4 = inlined_call_operand.vmem [shape: f32[128,128], index: 4, kind: input, shape index: {}]
  %s5 = inlined_call_operand.vmem [shape: f32[1,128], index: 5, kind: input, shape index: {}]
  %s6 = inlined_call_operand.vmem [shape: f32[1,128], index: 6, kind: input, shape index: {}]
  %s7 = inlined_call_operand.vmem [shape: f32[1,128], index: 7, kind: input, shape index: {}]
  %s8 = inlined_call_operand.vmem [shape: f32[8,128], index: 8, kind: output, shape index: {}]
  %s9 = sld [smem:[#allocation0]]
  $region50: #{_noisy_linear_impl.1} parent=0
    _
  %s11 = ssub.s32 1, %s9
  %s12 = scalar_select 0, %s11, %s9
  %13 = sst [smem:[#allocation3]] %s0
  // Predicated region
  $region2: #{_noisy_linear_impl.1} parent=0 // pred_check
    _
  $region3: #{_noisy_linear_impl.1} parent=0 // pred_check_branch
    %15 = sbr.rel (0) target = $region5
  $region4: #{_noisy_linear_impl.1} parent=0 // pred_region
    _
  $region5: #{_noisy_linear_impl.1} parent=0 // pred_fallthru
    _
  // Predicated region
  $region6: #{_noisy_linear_impl.1} parent=0 // pred_check
    _
  $region7: #{_noisy_linear_impl.1} parent=0 // pred_check_branch
    %17 = sbr.rel (0) target = $region9
  $region8: #{_noisy_linear_impl.1} parent=0 // pred_region
    _
  $region9: #{_noisy_linear_impl.1} parent=0 // pred_fallthru
    _
  // Predicated region
  $region10: #{_noisy_linear_impl.1} parent=0 // pred_check
    _
  $region11: #{_noisy_linear_impl.1} parent=0 // pred_check_branch
    %19 = sbr.rel (0) target = $region13
  $region12: #{_noisy_linear_impl.1} parent=0 // pred_region
    _
  $region13: #{_noisy_linear_impl.1} parent=0 // pred_fallthru
    _
  // Predicated region
  $region14: #{_noisy_linear_impl.1} parent=0 // pred_check
    _
  $region15: #{_noisy_linear_impl.1} parent=0 // pred_check_branch
    %21 = sbr.rel (0) target = $region17
  $region16: #{_noisy_linear_impl.1} parent=0 // pred_region
    _
  $region17: #{_noisy_linear_impl.1} parent=0 // pred_fallthru
    _
  // Predicated region
  $region18: #{_noisy_linear_impl.1} parent=0 // pred_check
    _
  $region19: #{_noisy_linear_impl.1} parent=0 // pred_check_branch
    %23 = sbr.rel (0) target = $region21
  $region20: #{_noisy_linear_impl.1} parent=0 // pred_region
    _
  $region21: #{_noisy_linear_impl.1} parent=0 // pred_fallthru
    _
  // Predicated region
  $region22: #{_noisy_linear_impl.1} parent=0 // pred_check
    _
  $region23: #{_noisy_linear_impl.1} parent=0 // pred_check_branch
    %25 = sbr.rel (0) target = $region25
  $region24: #{_noisy_linear_impl.1} parent=0 // pred_region
    _
  $region25: #{_noisy_linear_impl.1} parent=0 // pred_fallthru
    _
  // Predicated region
  $region26: #{_noisy_linear_impl.1} parent=0 // pred_check
    _
  $region27: #{_noisy_linear_impl.1} parent=0 // pred_check_branch
    %27 = sbr.rel (0) target = $region29
  $region28: #{_noisy_linear_impl.1} parent=0 // pred_region
    _
  $region29: #{_noisy_linear_impl.1} parent=0 // pred_fallthru
    _
  // Predicated region
  $region30: #{_noisy_linear_impl.1} parent=0 // pred_check
    _
  $region31: #{_noisy_linear_impl.1} parent=0 // pred_check_branch
    %29 = sbr.rel (0) target = $region33
  $region32: #{_noisy_linear_impl.1} parent=0 // pred_region
    _
  $region33: #{_noisy_linear_impl.1} parent=0 // pred_fallthru
    _
  %s30 = sld [smem:[#allocation3]]
  %p31 = scmp.eq.s32.totalorder 0, 0
  // Predicated region
  $region34: #{_noisy_linear_impl.1} parent=0 // pred_check
    %p32 = pneg %p31
  $region35: #{_noisy_linear_impl.1} parent=0 // pred_check_branch
    %34 = sbr.rel (%p32) target = $region37
  $region36: #{_noisy_linear_impl.1} parent=0 // pred_region
    %35 = vst [vmem:[#allocation2] sm:$0xff] 0.0
  $region37: #{_noisy_linear_impl.1} parent=0 // pred_fallthru
    _
  %v36 = vld [vmem:[%s2] sm:$0xff]
  %v37 = vld [vmem:[%s2 + $0x8] sm:$0xff]
  %v38 = vld [vmem:[%s2 + $0x10] sm:$0xff]
  %v39 = vld [vmem:[%s2 + $0x18] sm:$0xff]
  %v40 = vld [vmem:[%s2 + $0x20] sm:$0xff]
  %v41 = vld [vmem:[%s2 + $0x28] sm:$0xff]
  %v42 = vld [vmem:[%s2 + $0x30] sm:$0xff]
  %v43 = vld [vmem:[%s2 + $0x38] sm:$0xff]
  %v44 = vld [vmem:[%s2 + $0x40] sm:$0xff]
  %v45 = vld [vmem:[%s2 + $0x48] sm:$0xff]
  %v46 = vld [vmem:[%s2 + $0x50] sm:$0xff]
  %v47 = vld [vmem:[%s2 + $0x58] sm:$0xff]
  %v48 = vld [vmem:[%s2 + $0x60] sm:$0xff]
  %v49 = vld [vmem:[%s2 + $0x68] sm:$0xff]
  %v50 = vld [vmem:[%s2 + $0x70] sm:$0xff]
  %v51 = vld [vmem:[%s2 + $0x78] sm:$0xff]
  %v52 = vld [vmem:[%s3] sm:$0xff]
  %v53 = vld [vmem:[%s3 + $0x8] sm:$0xff]
  %v54 = vld [vmem:[%s3 + $0x10] sm:$0xff]
  %v55 = vld [vmem:[%s3 + $0x18] sm:$0xff]
  %v56 = vld [vmem:[%s3 + $0x20] sm:$0xff]
  %v57 = vld [vmem:[%s3 + $0x28] sm:$0xff]
  %v58 = vld [vmem:[%s3 + $0x30] sm:$0xff]
  %v59 = vld [vmem:[%s3 + $0x38] sm:$0xff]
  %v60 = vld [vmem:[%s3 + $0x40] sm:$0xff]
  %v61 = vld [vmem:[%s3 + $0x48] sm:$0xff]
  %v62 = vld [vmem:[%s3 + $0x50] sm:$0xff]
  %v63 = vld [vmem:[%s3 + $0x58] sm:$0xff]
  %v64 = vld [vmem:[%s3 + $0x60] sm:$0xff]
  %v65 = vld [vmem:[%s3 + $0x68] sm:$0xff]
  %v66 = vld [vmem:[%s3 + $0x70] sm:$0xff]
  %v67 = vld [vmem:[%s3 + $0x78] sm:$0xff]
  %v68 = vld [vmem:[%s4] sm:$0xff]
  %v69 = vld [vmem:[%s4 + $0x8] sm:$0xff]
  %v70 = vld [vmem:[%s4 + $0x10] sm:$0xff]
  %v71 = vld [vmem:[%s4 + $0x18] sm:$0xff]
  %v72 = vld [vmem:[%s4 + $0x20] sm:$0xff]
  %v73 = vld [vmem:[%s4 + $0x28] sm:$0xff]
  %v74 = vld [vmem:[%s4 + $0x30] sm:$0xff]
  %v75 = vld [vmem:[%s4 + $0x38] sm:$0xff]
  %v76 = vld [vmem:[%s4 + $0x40] sm:$0xff]
  %v77 = vld [vmem:[%s4 + $0x48] sm:$0xff]
  %v78 = vld [vmem:[%s4 + $0x50] sm:$0xff]
  %v79 = vld [vmem:[%s4 + $0x58] sm:$0xff]
  %v80 = vld [vmem:[%s4 + $0x60] sm:$0xff]
  %v81 = vld [vmem:[%s4 + $0x68] sm:$0xff]
  %v82 = vld [vmem:[%s4 + $0x70] sm:$0xff]
  %v83 = vld [vmem:[%s4 + $0x78] sm:$0xff]
  %v84 = vmul.f32 %v52, %v68
  %v85 = vmul.f32 %v53, %v69
  %v86 = vmul.f32 %v54, %v70
  %v87 = vmul.f32 %v55, %v71
  %v88 = vmul.f32 %v56, %v72
  %v89 = vmul.f32 %v57, %v73
  %v90 = vmul.f32 %v58, %v74
  %v91 = vmul.f32 %v59, %v75
  %v92 = vmul.f32 %v60, %v76
  %v93 = vmul.f32 %v61, %v77
  %v94 = vmul.f32 %v62, %v78
  %v95 = vmul.f32 %v63, %v79
  %v96 = vmul.f32 %v64, %v80
  %v97 = vmul.f32 %v65, %v81
  %v98 = vmul.f32 %v66, %v82
  %v99 = vmul.f32 %v67, %v83
  %v100 = vstv %s30
  %v101 = vmul.f32 %v84, %v100
  %v102 = vmul.f32 %v85, %v100
  %v103 = vmul.f32 %v86, %v100
  %v104 = vmul.f32 %v87, %v100
  %v105 = vmul.f32 %v88, %v100
  %v106 = vmul.f32 %v89, %v100
  %v107 = vmul.f32 %v90, %v100
  %v108 = vmul.f32 %v91, %v100
  %v109 = vmul.f32 %v92, %v100
  %v110 = vmul.f32 %v93, %v100
  %v111 = vmul.f32 %v94, %v100
  %v112 = vmul.f32 %v95, %v100
  %v113 = vmul.f32 %v96, %v100
  %v114 = vmul.f32 %v97, %v100
  %v115 = vmul.f32 %v98, %v100
  %v116 = vmul.f32 %v99, %v100
  %v117 = vadd.f32 %v36, %v101
  %v118 = vadd.f32 %v37, %v102
  %v119 = vadd.f32 %v38, %v103
  %v120 = vadd.f32 %v39, %v104
  %v121 = vadd.f32 %v40, %v105
  %v122 = vadd.f32 %v41, %v106
  %v123 = vadd.f32 %v42, %v107
  %v124 = vadd.f32 %v43, %v108
  %v125 = vadd.f32 %v44, %v109
  %v126 = vadd.f32 %v45, %v110
  %v127 = vadd.f32 %v46, %v111
  %v128 = vadd.f32 %v47, %v112
  %v129 = vadd.f32 %v48, %v113
  %v130 = vadd.f32 %v49, %v114
  %v131 = vadd.f32 %v50, %v115
  %v132 = vadd.f32 %v51, %v116
  %v133 = vld [vmem:[#allocation2] sm:$0xff]
  %v134 = vld [vmem:[%s1] sm:$0xff]
  %135 = vmatprep.subr.mxu0 0.0
  %136 = vmatpush1.msra.mxu0 %v117
  %137 = vmatprep.subr.mxu0 0.0
  %138 = vmatpush1.msra.mxu0 %v118
  %139 = vmatprep.subr.mxu0 0.0
  %140 = vmatpush1.msra.mxu0 %v119
  %141 = vmatprep.subr.mxu0 0.0
  %142 = vmatpush1.msra.mxu0 %v120
  %143 = vmatprep.subr.mxu0 0.0
  %144 = vmatpush1.msra.mxu0 %v121
  %145 = vmatprep.subr.mxu0 0.0
  %146 = vmatpush1.msra.mxu0 %v122
  %147 = vmatprep.subr.mxu0 0.0
  %148 = vmatpush1.msra.mxu0 %v123
  %149 = vmatprep.subr.mxu0 0.0
  %150 = vmatpush1.msra.mxu0 %v124
  %151 = vmatprep.subr.mxu0 0.0
  %152 = vmatpush1.msra.mxu0 %v125
  %153 = vmatprep.subr.mxu0 0.0
  %154 = vmatpush1.msra.mxu0 %v126
  %155 = vmatprep.subr.mxu0 0.0
  %156 = vmatpush1.msra.mxu0 %v127
  %157 = vmatprep.subr.mxu0 0.0
  %158 = vmatpush1.msra.mxu0 %v128
  %159 = vmatprep.subr.mxu0 0.0
  %160 = vmatpush1.msra.mxu0 %v129
  %161 = vmatprep.subr.mxu0 0.0
  %162 = vmatpush1.msra.mxu0 %v130
  %163 = vmatprep.subr.mxu0 0.0
  %164 = vmatpush1.msra.mxu0 %v131
  %165 = vmatprep.subr.mxu0 0.0
  %166 = vmatpush1.msra.mxu0 %v132
  %167 = vmatprep.subr.mxu0 0.0
  %168 = vmatpush1.msra.mxu0 0.0
  %169 = vmatprep.subr.mxu0 0.0
  %170 = vmatpush1.msra.mxu0 0.0
  %171 = vmatprep.subr.mxu0 0.0
  %172 = vmatpush1.msra.mxu0 0.0
  %173 = vmatprep.subr.mxu0 0.0
  %174 = vmatpush1.msra.mxu0 0.0
  %175 = vmatprep.subr.mxu0 0.0
  %176 = vmatpush1.msra.mxu0 0.0
  %177 = vmatprep.subr.mxu0 0.0
  %178 = vmatpush1.msra.mxu0 0.0
  %179 = vmatprep.subr.mxu0 0.0
  %180 = vmatpush1.msra.mxu0 0.0
  %181 = vmatprep.subr.mxu0 0.0
  %182 = vmatpush1.msra.mxu0 0.0
  %183 = vmatprep.subr.mxu0 0.0
  %184 = vmatpush1.msra.mxu0 0.0
  %185 = vmatprep.subr.mxu0 0.0
  %186 = vmatpush1.msra.mxu0 0.0
  %187 = vmatprep.subr.mxu0 0.0
  %188 = vmatpush1.msra.mxu0 0.0
  %189 = vmatprep.subr.mxu0 0.0
  %190 = vmatpush1.msra.mxu0 0.0
  %191 = vmatprep.subr.mxu0 0.0
  %192 = vmatpush1.msra.mxu0 0.0
  %193 = vmatprep.subr.mxu0 0.0
  %194 = vmatpush1.msra.mxu0 0.0
  %195 = vmatprep.subr.mxu0 0.0
  %196 = vmatpush1.msra.mxu0 0.0
  %197 = vmatprep.subr.mxu0 0.0
  %198 = vmatpush1.msra.mxu0 0.0
  %199 = vmatprep.mubr.f32.mxu0 0.0
  %200 = vmatmul.mubr.f32.gmra.mrb[0].mxu0 %v134
  %v201 = vpop.f32.mrb[0].mxu0
  %v202 = vadd.f32 0.0, %v201
  %v203 = vpop.f32.mrb[0].mxu0
  %204 = vdwg.mxu0
  %v205 = vadd.f32 %v133, %v202
  %206 = vst [vmem:[#allocation2] sm:$0xff] %v205
  // Predicated region
  $region38: #{_noisy_linear_impl.1} parent=0 // pred_check
    %p207 = pneg %p31
  $region39: #{_noisy_linear_impl.1} parent=0 // pred_check_branch
    %209 = sbr.rel (%p207) target = $region41
  $region40: #{_noisy_linear_impl.1} parent=0 // pred_region
    %v210 = vld [vmem:[%s5] sm:$0x1]
    %v211 = vld [vmem:[%s6] sm:$0x1]
    %v212 = vld [vmem:[%s7] sm:$0x1]
    %v213 = vmul.f32 %v211, %v212
    %v214 = vmul.f32 %v213, %v100
    %v215 = vadd.f32 %v210, %v214
    %v216 = vld [vmem:[#allocation2] sm:$0xff]
    %v218 = vlaneseq
    %v219 = vshrl.u32 %v218, 7
    %v220 = vsub.s32 0, %v219
    %v221 = vrot.slane %v215, %v220
    %v223 = vadd.f32 %v216, %v221
    %224 = vst [vmem:[%s8] sm:$0xff] %v223
  $region41: #{_noisy_linear_impl.1} parent=0 // pred_fallthru
    _
  // Predicated region
  $region42: #{_noisy_linear_impl.1} parent=0 // pred_check
    _
  $region43: #{_noisy_linear_impl.1} parent=0 // pred_check_branch
    %226 = sbr.rel (0) target = $region45
  $region44: #{_noisy_linear_impl.1} parent=0 // pred_region
    _
  $region45: #{_noisy_linear_impl.1} parent=0 // pred_fallthru
    _
  // Predicated region
  $region46: #{_noisy_linear_impl.1} parent=0 // pred_check
    _
  $region47: #{_noisy_linear_impl.1} parent=0 // pred_check_branch
    %228 = sbr.rel (0) target = $region49
  $region48: #{_noisy_linear_impl.1} parent=0 // pred_region
    _
  $region49: #{_noisy_linear_impl.1} parent=0 // pred_fallthru
    _

</llo_original>
